<compile_context>
chip_gen: v7x
topology: tpu7x:2x2x1
jax: 0.10.0
libtpu: 0.0.40
codegen_flags: <defaults>
</compile_context>

<pallas_src>
import jax
import jax.numpy as jnp
from jax.scipy.special import logsumexp
from jax.experimental import pallas as pl
from jax.experimental.pallas import tpu as pltpu


# --------------------------------------------------------------------------- #
# Tiling / VMEM helpers
# --------------------------------------------------------------------------- #
def _vmem_limit_bytes():
    """Per-generation VMEM budget: ~half physical capacity, capped at 64 MiB
    (v5e/v6e: 128 MiB -> 64 MiB; v7x: 64 MiB -> 32 MiB; fallback: 32 MiB)."""
    cap = 64 << 20
    try:
        info = pltpu.get_tpu_info()
        cap = int(getattr(info, "vmem_capacity_bytes", cap))
    except Exception:
        pass
    return max(16 << 20, min(cap // 2, 64 << 20))


def _pick_tile(n, target, align=128):
    """Largest divisor of n that is a multiple of `align` and <= target.

    Falls back to the full dimension (always a legal block shape) when n is
    small or has no lane-aligned divisor.  128-alignment keeps the logits tile
    and the partial-LSE output blocks lane-dense (unmasked vst/vld)."""
    if n <= target:
        return n
    if n % align == 0:
        start = (min(target, n) // align) * align
        for t in range(start, align - 1, -align):
            if n % t == 0:
                return t
    return n


def _kernel_b_tiles(B, P, budget):
    """Pick (TR, TC) so kernel B is MXU-bound (arithmetic intensity ~ TR flops per
    streamed pj byte in bf16) while double-buffered tiles + f32 logits/exp slabs
    fit the VMEM budget."""
    tr_target, tc_target = 2048, 512
    while True:
        TR = _pick_tile(B, tr_target)
        TC = _pick_tile(B, tc_target)
        need = 2 * TR * P * 2 + 2 * TC * P * 2 + 3 * TR * TC * 4
        if need <= budget or (tr_target <= 128 and tc_target <= 128):
            return TR, TC
        if tr_target > 128:
            tr_target //= 2
        else:
            tc_target //= 2


# --------------------------------------------------------------------------- #
# Kernel A: projections + L2 row-normalization + scale folding + diagonal
# --------------------------------------------------------------------------- #
def _proj_norm_kernel(scale_ref, zi_ref, zj_ref, wi_ref, wj_ref,
                      pi_ref, pj_ref, diag_ref):
    # MXU projections; f32 accumulation without upcasting the operands.
    pi = jnp.dot(zi_ref[...], wi_ref[...], preferred_element_type=jnp.float32)
    pj = jnp.dot(zj_ref[...], wj_ref[...], preferred_element_type=jnp.float32)

    # Row L2 normalization via rsqrt (EUP slot) instead of sqrt + divide (VALU).
    pi_n = pi * jax.lax.rsqrt(jnp.sum(pi * pi, axis=1, keepdims=True))
    pj_n = pj * jax.lax.rsqrt(jnp.sum(pj * pj, axis=1, keepdims=True))

    # exp(temperature) precomputed in the wrapper, read from SMEM; fold the
    # scale into the (B, P) projection instead of the (B, B) logits.
    pi_s = pi_n * scale_ref[0, 0]

    # bf16 stores: halves HBM write+read traffic and feeds kernel B's MXU in bf16.
    pi_ref[...] = pi_s.astype(pi_ref.dtype)
    pj_ref[...] = pj_n.astype(pj_ref.dtype)

    # diag[b] = logits[b, b] -- one B*P multiply-reduce; stored lane-dense (1, TB).
    d = jnp.sum(pi_s * pj_n, axis=1, keepdims=True)       # (TB, 1), f32
    diag_ref[...] = d.reshape(diag_ref.shape)             # (1, TB)


# --------------------------------------------------------------------------- #
# Kernel B: one (TR, TC) logits tile -> row & column partial logsumexp vectors
# --------------------------------------------------------------------------- #
def _tile_lse_kernel(pi_ref, pj_ref, row_ref, col_ref):
    # NT matmul (no explicit transpose): bf16 x bf16, f32 accumulation.
    s = jax.lax.dot_general(
        pi_ref[...], pj_ref[...],
        dimension_numbers=(((1,), (1,)), ((), ())),
        preferred_element_type=jnp.float32)                # (TR, TC)

    rm = jnp.max(s, axis=1, keepdims=True)                 # (TR, 1) row maxes (XLU)
    cm = jnp.max(s, axis=0, keepdims=True)                 # (1, TC) col maxes (XLU)
    t = jnp.max(rm)                                        # tile max (scalar)

    # Single full-tile exp (EUP); row and column partial sums both reuse it.
    e = jnp.exp(s - t)                                     # (TR, TC)
    re = jnp.sum(e, axis=1, keepdims=True)                 # (TR, 1)
    ce = jnp.sum(e, axis=0, keepdims=True)                 # (1, TC)

    # Partial logsumexp of this tile.  t + log(sum) is exact when nothing
    # underflows; max(., row/col max) is a tight finite fallback (true LSE >= max),
    # so no -inf / 0*inf can reach the wrapper merge even for extreme logit ranges.
    row_plse = jnp.maximum(t + jnp.log(re), rm)            # (TR, 1)
    col_plse = jnp.maximum(t + jnp.log(ce), cm)            # (1, TC)

    # Lane-dense stores (1, 1, TR) / (1, 1, TC).
    row_ref[...] = row_plse.reshape(row_ref.shape)
    col_ref[...] = col_plse.reshape(col_ref.shape)


# --------------------------------------------------------------------------- #
# Wrapper
# --------------------------------------------------------------------------- #
def clip_loss(z_i, z_j, W_i, W_j, temperature,
              *, batch_tile=None, row_tile=None, col_tile=None):
    B, L = z_i.shape
    P = W_i.shape[1]
    vmem_limit = _vmem_limit_bytes()
    budget = int(vmem_limit * 0.75)

    # exp(temperature) hoisted out of the kernel; passed as an SMEM scalar.
    scale = jnp.exp(jnp.asarray(temperature, jnp.float32)).reshape(1, 1)

    # ---------------- Kernel A: projections / normalization / diagonal ------
    TB = batch_tile or _pick_tile(B, 512)
    assert B % TB == 0, "batch_tile must divide the batch size"
    nb = B // TB

    pi_s, pj_n, diag = pl.pallas_call(
        _proj_norm_kernel,
        out_shape=(
            jax.ShapeDtypeStruct((B, P), jnp.bfloat16),   # normalize(z_i @ W_i) * exp(T)
            jax.ShapeDtypeStruct((B, P), jnp.bfloat16),   # normalize(z_j @ W_j)
            jax.ShapeDtypeStruct((1, B), jnp.float32),    # logits diagonal, lane-dense
        ),
        grid_spec=pltpu.PrefetchScalarGridSpec(
            num_scalar_prefetch=0,
            grid=(nb,),
            in_specs=[
                pl.BlockSpec(memory_space=pltpu.MemorySpace.SMEM),  # exp(temperature)
                pl.BlockSpec((TB, L), lambda b: (b, 0)),            # z_i tile
                pl.BlockSpec((TB, L), lambda b: (b, 0)),            # z_j tile
                pl.BlockSpec((L, P), lambda b: (0, 0)),             # W_i (VMEM resident)
                pl.BlockSpec((L, P), lambda b: (0, 0)),             # W_j (VMEM resident)
            ],
            out_specs=[
                pl.BlockSpec((TB, P), lambda b: (b, 0)),
                pl.BlockSpec((TB, P), lambda b: (b, 0)),
                pl.BlockSpec((1, TB), lambda b: (0, b)),
            ],
        ),
        compiler_params=pltpu.CompilerParams(
            dimension_semantics=("parallel",),
            vmem_limit_bytes=vmem_limit),
    )(scale, z_i, z_j, W_i, W_j)

    # ---------------- Kernel B: tiled bidirectional partial logsumexp -------
    if row_tile is None or col_tile is None:
        auto_tr, auto_tc = _kernel_b_tiles(B, P, budget)
        TR = row_tile or auto_tr
        TC = col_tile or auto_tc
    else:
        TR, TC = row_tile, col_tile
    assert B % TR == 0 and B % TC == 0, "row/col tiles must divide the batch size"
    ni, nk = B // TR, B // TC

    # TODO(synk): if xprof shows exposed pj DMA after enlarging TR, deepen the pj
    # pipeline with pipeline_mode=pl.Buffered(3) on its BlockSpec.
    row_plse, col_plse = pl.pallas_call(
        _tile_lse_kernel,
        out_shape=(
            jax.ShapeDtypeStruct((nk, 1, B), jnp.float32),  # per-col-tile row LSE partials
            jax.ShapeDtypeStruct((ni, 1, B), jnp.float32),  # per-row-tile col LSE partials
        ),
        grid_spec=pltpu.PrefetchScalarGridSpec(
            num_scalar_prefetch=0,
            grid=(ni, nk),
            in_specs=[
                pl.BlockSpec((TR, P), lambda i, k: (i, 0)),  # pi rows (revisited across k)
                pl.BlockSpec((TC, P), lambda i, k: (k, 0)),  # pj cols (streamed)
            ],
            out_specs=[
                pl.BlockSpec((1, 1, TR), lambda i, k: (k, 0, i)),
                pl.BlockSpec((1, 1, TC), lambda i, k: (i, 0, k)),
            ],
        ),
        compiler_params=pltpu.CompilerParams(
            # Every grid step writes distinct output blocks -> both axes parallel
            # (engages both TensorCores on v7x; harmless on v5e/v6e).
            dimension_semantics=("parallel", "parallel"),
            vmem_limit_bytes=vmem_limit),
    )(pi_s, pj_n)

    # ---------------- Tiny O((ni + nk) * B) merge in plain JAX --------------
    row_lse = logsumexp(row_plse[:, 0, :], axis=0)          # (B,): LSE over logits rows
    col_lse = logsumexp(col_plse[:, 0, :], axis=0)          # (B,): LSE over logits cols
    d = diag[0]
    loss_i_vec = row_lse - d
    loss_j_vec = col_lse - d
    mean_i = jnp.mean(loss_i_vec)
    mean_j = jnp.mean(loss_j_vec)
    loss = 0.5 * (mean_i + mean_j)
    return loss, mean_i, mean_j


# --------------------------------------------------------------------------- #
# Pure-JAX reference mirroring the PyTorch forward
# --------------------------------------------------------------------------- #
def clip_loss_ref(z_i, z_j, W_i, W_j, temperature):
    pi = z_i @ W_i
    pi = pi / jnp.linalg.norm(pi, axis=1, keepdims=True)
    pj = z_j @ W_j
    pj = pj / jnp.linalg.norm(pj, axis=1, keepdims=True)
    logits = pi @ pj.T * jnp.exp(jnp.asarray(temperature, jnp.float32))
    B = logits.shape[0]
    idx = jnp.arange(B)

    def ce(lg):
        lse = logsumexp(lg, axis=1)
        return lse - lg[idx, idx]

    li = ce(logits)
    lj = ce(logits.T)
    loss = (li + lj) / 2.0
    return loss.mean(), li.mean(), lj.mean()


if __name__ == "__main__":
    B, LATENT, PROJ = 8, 32, 16
    temperature = 0.07

    key = jax.random.PRNGKey(0)
    k1, k2, k3, k4 = jax.random.split(key, 4)
    z_i = jax.random.normal(k1, (B, LATENT), dtype=jnp.float32)
    z_j = jax.random.normal(k2, (B, LATENT), dtype=jnp.float32)
    # Deterministic parameter init (stand-in for torch.randn in __init__).
    W_i = jax.random.normal(k3, (LATENT, PROJ), dtype=jnp.float32)
    W_j = jax.random.normal(k4, (LATENT, PROJ), dtype=jnp.float32)

    loss, loss_i, loss_j = jax.block_until_ready(
        clip_loss(z_i, z_j, W_i, W_j, temperature)
    )

    ref_loss, ref_i, ref_j = clip_loss_ref(z_i, z_j, W_i, W_j, temperature)
    # bf16 projections feed the logits matmul -> tolerance loosened vs f32 ref.
    assert jnp.allclose(loss, ref_loss, rtol=2e-2, atol=2e-2), (loss, ref_loss)
    assert jnp.allclose(loss_i, ref_i, rtol=2e-2, atol=2e-2), (loss_i, ref_i)
    assert jnp.allclose(loss_j, ref_j, rtol=2e-2, atol=2e-2), (loss_j, ref_j)

    print("KERNEL_OK")
</pallas_src>

<mosaic_0001>
module attributes {stable_mosaic.version = 11 : i64} {
  func.func @_proj_norm_kernel(%arg0: i32, %arg1: memref<1x1xf32, #tpu.memory_space<smem>>, %arg2: memref<8x32xf32, #tpu.memory_space<vmem>>, %arg3: memref<8x32xf32, #tpu.memory_space<vmem>>, %arg4: memref<32x16xf32, #tpu.memory_space<vmem>>, %arg5: memref<32x16xf32, #tpu.memory_space<vmem>>, %arg6: memref<8x16xbf16, #tpu.memory_space<vmem>>, %arg7: memref<8x16xbf16, #tpu.memory_space<vmem>>, %arg8: memref<1x8xf32, #tpu.memory_space<vmem>>) attributes {dimension_semantics = [#tpu.dimension_semantics<parallel>], iteration_bounds = array<i64: 1>, scalar_prefetch = 0 : i64, scratch_operands = 0 : i64, tpu.core_type = #tpu.core_type<tc>, window_params = [{transform_indices = @transform_0, window_bounds = array<i64: 1, 1>}, {transform_indices = @transform_1, window_bounds = array<i64: 8, 32>}, {transform_indices = @transform_2, window_bounds = array<i64: 8, 32>}, {pipeline_mode = #tpu.pipeline_mode<synchronous>, transform_indices = @transform_3, window_bounds = array<i64: 32, 16>}, {pipeline_mode = #tpu.pipeline_mode<synchronous>, transform_indices = @transform_4, window_bounds = array<i64: 32, 16>}, {transform_indices = @transform_5, window_bounds = array<i64: 8, 16>}, {transform_indices = @transform_6, window_bounds = array<i64: 8, 16>}, {transform_indices = @transform_7, window_bounds = array<i64: 1, 8>}]} {
    %c0 = arith.constant 0 : index
    %c0_0 = arith.constant 0 : index
    %0 = vector.load %arg2[%c0, %c0_0] : memref<8x32xf32, #tpu.memory_space<vmem>>, vector<8x32xf32>
    %c0_1 = arith.constant 0 : index
    %c0_2 = arith.constant 0 : index
    %1 = vector.load %arg4[%c0_1, %c0_2] : memref<32x16xf32, #tpu.memory_space<vmem>>, vector<32x16xf32>
    %cst = arith.constant dense<0.000000e+00> : vector<8x16xf32>
    %2 = tpu.matmul %0, %1, %cst {dimension_numbers = #tpu.dot_dimension_numbers<[1], [0], [0], [1], [0, 0, 1, 1], [], []>} : vector<8x32xf32>, vector<32x16xf32>, vector<8x16xf32> -> vector<8x16xf32>
    %c0_3 = arith.constant 0 : index
    %c0_4 = arith.constant 0 : index
    %3 = vector.load %arg3[%c0_3, %c0_4] : memref<8x32xf32, #tpu.memory_space<vmem>>, vector<8x32xf32>
    %c0_5 = arith.constant 0 : index
    %c0_6 = arith.constant 0 : index
    %4 = vector.load %arg5[%c0_5, %c0_6] : memref<32x16xf32, #tpu.memory_space<vmem>>, vector<32x16xf32>
    %cst_7 = arith.constant dense<0.000000e+00> : vector<8x16xf32>
    %5 = tpu.matmul %3, %4, %cst_7 {dimension_numbers = #tpu.dot_dimension_numbers<[1], [0], [0], [1], [0, 0, 1, 1], [], []>} : vector<8x32xf32>, vector<32x16xf32>, vector<8x16xf32> -> vector<8x16xf32>
    %6 = arith.mulf %2, %2 : vector<8x16xf32>
    %cst_8 = arith.constant dense<0.000000e+00> : vector<8xf32>
    %7 = vector.multi_reduction <add>, %6, %cst_8 [1] : vector<8x16xf32> to vector<8xf32>
    %8 = vector.shape_cast %7 : vector<8xf32> to vector<8x1xf32>
    %9 = math.rsqrt %8 : vector<8x1xf32>
    %10 = vector.broadcast %9 : vector<8x1xf32> to vector<8x16xf32>
    %11 = arith.mulf %2, %10 : vector<8x16xf32>
    %12 = arith.mulf %5, %5 : vector<8x16xf32>
    %cst_9 = arith.constant dense<0.000000e+00> : vector<8xf32>
    %13 = vector.multi_reduction <add>, %12, %cst_9 [1] : vector<8x16xf32> to vector<8xf32>
    %14 = vector.shape_cast %13 : vector<8xf32> to vector<8x1xf32>
    %15 = math.rsqrt %14 : vector<8x1xf32>
    %16 = vector.broadcast %15 : vector<8x1xf32> to vector<8x16xf32>
    %17 = arith.mulf %5, %16 : vector<8x16xf32>
    %c0_10 = arith.constant 0 : index
    %c0_11 = arith.constant 0 : index
    %18 = memref.load %arg1[%c0_10, %c0_11] : memref<1x1xf32, #tpu.memory_space<smem>>
    %19 = vector.broadcast %18 : f32 to vector<8x16xf32>
    %20 = arith.mulf %11, %19 : vector<8x16xf32>
    %21 = arith.truncf %20 : vector<8x16xf32> to vector<8x16xbf16>
    %c0_12 = arith.constant 0 : index
    %c0_13 = arith.constant 0 : index
    %22 = vector.load %arg6[%c0_12, %c0_13] : memref<8x16xbf16, #tpu.memory_space<vmem>>, vector<8x16xbf16>
    tpu.vector_store %arg6[%c0_12, %c0_13], %21 {strides = array<i32>} : memref<8x16xbf16, #tpu.memory_space<vmem>>, vector<8x16xbf16>,
    %23 = arith.truncf %17 : vector<8x16xf32> to vector<8x16xbf16>
    %c0_14 = arith.constant 0 : index
    %c0_15 = arith.constant 0 : index
    %24 = vector.load %arg7[%c0_14, %c0_15] : memref<8x16xbf16, #tpu.memory_space<vmem>>, vector<8x16xbf16>
    tpu.vector_store %arg7[%c0_14, %c0_15], %23 {strides = array<i32>} : memref<8x16xbf16, #tpu.memory_space<vmem>>, vector<8x16xbf16>,
    %25 = arith.mulf %20, %17 : vector<8x16xf32>
    %cst_16 = arith.constant dense<0.000000e+00> : vector<8xf32>
    %26 = vector.multi_reduction <add>, %25, %cst_16 [1] : vector<8x16xf32> to vector<8xf32>
    %27 = vector.shape_cast %26 : vector<8xf32> to vector<8x1xf32>
    %28 = vector.shape_cast %27 : vector<8x1xf32> to vector<1x8xf32>
    %c0_17 = arith.constant 0 : index
    %c0_18 = arith.constant 0 : index
    %29 = vector.load %arg8[%c0_17, %c0_18] : memref<1x8xf32, #tpu.memory_space<vmem>>, vector<1x8xf32>
    tpu.vector_store %arg8[%c0_17, %c0_18], %28 {strides = array<i32>} : memref<1x8xf32, #tpu.memory_space<vmem>>, vector<1x8xf32>,
    return
  }
  func.func @transform_0(%arg0: i32) -> (i32, i32) {
    %c0_i32 = arith.constant 0 : i32
    %c0_i32_0 = arith.constant 0 : i32
    %c0_i32_1 = arith.constant 0 : i32
    return %c0_i32, %c0_i32_0 : i32, i32
  }
  func.func @transform_1(%arg0: i32) -> (i32, i32) {
    %c0_i32 = arith.constant 0 : i32
    %c0_i32_0 = arith.constant 0 : i32
    return %arg0, %c0_i32 : i32, i32
  }
  func.func @transform_2(%arg0: i32) -> (i32, i32) {
    %c0_i32 = arith.constant 0 : i32
    %c0_i32_0 = arith.constant 0 : i32
    return %arg0, %c0_i32 : i32, i32
  }
  func.func @transform_3(%arg0: i32) -> (i32, i32) {
    %c0_i32 = arith.constant 0 : i32
    %c0_i32_0 = arith.constant 0 : i32
    %c0_i32_1 = arith.constant 0 : i32
    return %c0_i32, %c0_i32_0 : i32, i32
  }
  func.func @transform_4(%arg0: i32) -> (i32, i32) {
    %c0_i32 = arith.constant 0 : i32
    %c0_i32_0 = arith.constant 0 : i32
    %c0_i32_1 = arith.constant 0 : i32
    return %c0_i32, %c0_i32_0 : i32, i32
  }
  func.func @transform_5(%arg0: i32) -> (i32, i32) {
    %c0_i32 = arith.constant 0 : i32
    %c0_i32_0 = arith.constant 0 : i32
    return %arg0, %c0_i32 : i32, i32
  }
  func.func @transform_6(%arg0: i32) -> (i32, i32) {
    %c0_i32 = arith.constant 0 : i32
    %c0_i32_0 = arith.constant 0 : i32
    return %arg0, %c0_i32 : i32, i32
  }
  func.func @transform_7(%arg0: i32) -> (i32, i32) {
    %c0_i32 = arith.constant 0 : i32
    %c0_i32_0 = arith.constant 0 : i32
    return %c0_i32, %arg0 : i32, i32
  }
}

</mosaic_0001>

<llo_original>
// kernel: tpu_custom_call.1
$region0: #{tpu_custom_call.1}
  #allocation0 [shape = 'u32[]', space=smem, size = 0x4, offset = 0x4, fixed_abs, tag = 'smem constant byte address 0x4 - core index']
  #allocation1 [shape = 'u32[144,128]{1,0:T(1,128)}', space=vmem, size = 0x12000, scoped, tag = 'internal scratch']
  #allocation2 [shape = 'f32[1,1]{1,0:T(1,128)S(6)}', space=smem, size = 0x200, scoped, tag = 'scoped memory for tpu_custom_call.1']
  %s0 = inlined_call_operand.<no memory space> [shape: f32[1,1], index: 0, kind: input, shape index: {}]
  %s1 = inlined_call_operand.vmem [shape: f32[8,32], index: 1, kind: input, shape index: {}]
  %s2 = inlined_call_operand.vmem [shape: f32[8,32], index: 2, kind: input, shape index: {}]
  %s3 = inlined_call_operand.vmem [shape: f32[32,16], index: 3, kind: input, shape index: {}]
  %s4 = inlined_call_operand.vmem [shape: f32[32,16], index: 4, kind: input, shape index: {}]
  %s5 = inlined_call_operand.hbm [shape: bf16[8,16], index: 5, kind: output, shape index: {0}]
  %s6 = inlined_call_operand.hbm [shape: bf16[8,16], index: 6, kind: output, shape index: {1}]
  %s7 = inlined_call_operand.hbm [shape: f32[1,8], index: 7, kind: output, shape index: {2}]
  %8 = xla_tuple %s5, %s6, %s7
  %s9 = sld [smem:[#allocation0]]
  $region46: #{tpu_custom_call.1} parent=0
    _
  %s11 = ssub.s32 1, %s9
  %s12 = scalar_select 0, %s11, %s9
  %13 = sst [smem:[#allocation2]] %s0
  $region1: #{tpu_custom_call.1} parent=0
    #allocation3 [shape = 'u8[2048]{0}', space=vmem, size = 0x800, scoped, tag = 'output window, operand 0, single buffered']
    #allocation4 [shape = 's32[1]{0}', space=sflag, size = 0x4, scoped, tag = 'scoped memory for tpu_custom_call.1']
    #allocation5 [shape = 'u8[2048]{0}', space=vmem, size = 0x800, scoped, tag = 'output window, operand 1, single buffered']
    #allocation6 [shape = 's32[1]{0}', space=sflag, size = 0x4, scoped, tag = 'scoped memory for tpu_custom_call.1']
    #allocation7 [shape = 'u8[512]{0}', space=vmem, size = 0x400, scoped, tag = 'output window, operand 2, single buffered']
    %14 = vsyncpa [#allocation4], 0
    %15 = vsyncpa [#allocation6], 0
    // Predicated region
    $region2: #{tpu_custom_call.1} parent=1 // pred_check
      _
    $region3: #{tpu_custom_call.1} parent=1 // pred_check_branch
      %17 = sbr.rel (0) target = $region5
    $region4: #{tpu_custom_call.1} parent=1 // pred_region
      _
    $region5: #{tpu_custom_call.1} parent=1 // pred_fallthru
      _
    // Predicated region
    $region6: #{tpu_custom_call.1} parent=1 // pred_check
      _
    $region7: #{tpu_custom_call.1} parent=1 // pred_check_branch
      %19 = sbr.rel (0) target = $region9
    $region8: #{tpu_custom_call.1} parent=1 // pred_region
      _
    $region9: #{tpu_custom_call.1} parent=1 // pred_fallthru
      _
    // Predicated region
    $region10: #{tpu_custom_call.1} parent=1 // pred_check
      _
    $region11: #{tpu_custom_call.1} parent=1 // pred_check_branch
      %21 = sbr.rel (0) target = $region13
    $region12: #{tpu_custom_call.1} parent=1 // pred_region
      _
    $region13: #{tpu_custom_call.1} parent=1 // pred_fallthru
      _
    // Predicated region
    $region14: #{tpu_custom_call.1} parent=1 // pred_check
      _
    $region15: #{tpu_custom_call.1} parent=1 // pred_check_branch
      %23 = sbr.rel (0) target = $region17
    $region16: #{tpu_custom_call.1} parent=1 // pred_region
      _
    $region17: #{tpu_custom_call.1} parent=1 // pred_fallthru
      _
    // Predicated region
    $region18: #{tpu_custom_call.1} parent=1 // pred_check
      _
    $region19: #{tpu_custom_call.1} parent=1 // pred_check_branch
      %25 = sbr.rel (0) target = $region21
    $region20: #{tpu_custom_call.1} parent=1 // pred_region
      _
    $region21: #{tpu_custom_call.1} parent=1 // pred_fallthru
      _
    %v26 = vld [vmem:[%s1] sm:$0xff]
    %v27 = vld [vmem:[%s3] sm:$0xff]
    %v28 = vld [vmem:[%s3 + $0x8] sm:$0xff]
    %v29 = vld [vmem:[%s3 + $0x10] sm:$0xff]
    %v30 = vld [vmem:[%s3 + $0x18] sm:$0xff]
    %vm31 = vcmask 261120
    %v33 = vsel %vm31, %v26, 0
    %35 = vmatprep.subr.mxu0 0.0
    %36 = vmatpush1.msra.mxu0 %v27
    %37 = vmatprep.subr.mxu0 0.0
    %38 = vmatpush1.msra.mxu0 %v28
    %39 = vmatprep.subr.mxu0 0.0
    %40 = vmatpush1.msra.mxu0 %v29
    %41 = vmatprep.subr.mxu0 0.0
    %42 = vmatpush1.msra.mxu0 %v30
    %43 = vmatprep.subr.mxu0 0.0
    %44 = vmatpush1.msra.mxu0 0.0
    %45 = vmatprep.subr.mxu0 0.0
    %46 = vmatpush1.msra.mxu0 0.0
    %47 = vmatprep.subr.mxu0 0.0
    %48 = vmatpush1.msra.mxu0 0.0
    %49 = vmatprep.subr.mxu0 0.0
    %50 = vmatpush1.msra.mxu0 0.0
    %51 = vmatprep.subr.mxu0 0.0
    %52 = vmatpush1.msra.mxu0 0.0
    %53 = vmatprep.subr.mxu0 0.0
    %54 = vmatpush1.msra.mxu0 0.0
    %55 = vmatprep.subr.mxu0 0.0
    %56 = vmatpush1.msra.mxu0 0.0
    %57 = vmatprep.subr.mxu0 0.0
    %58 = vmatpush1.msra.mxu0 0.0
    %59 = vmatprep.subr.mxu0 0.0
    %60 = vmatpush1.msra.mxu0 0.0
    %61 = vmatprep.subr.mxu0 0.0
    %62 = vmatpush1.msra.mxu0 0.0
    %63 = vmatprep.subr.mxu0 0.0
    %64 = vmatpush1.msra.mxu0 0.0
    %65 = vmatprep.subr.mxu0 0.0
    %66 = vmatpush1.msra.mxu0 0.0
    %67 = vmatprep.subr.mxu0 0.0
    %68 = vmatpush1.msra.mxu0 0.0
    %69 = vmatprep.subr.mxu0 0.0
    %70 = vmatpush1.msra.mxu0 0.0
    %71 = vmatprep.subr.mxu0 0.0
    %72 = vmatpush1.msra.mxu0 0.0
    %73 = vmatprep.subr.mxu0 0.0
    %74 = vmatpush1.msra.mxu0 0.0
    %75 = vmatprep.subr.mxu0 0.0
    %76 = vmatpush1.msra.mxu0 0.0
    %77 = vmatprep.subr.mxu0 0.0
    %78 = vmatpush1.msra.mxu0 0.0
    %79 = vmatprep.subr.mxu0 0.0
    %80 = vmatpush1.msra.mxu0 0.0
    %81 = vmatprep.subr.mxu0 0.0
    %82 = vmatpush1.msra.mxu0 0.0
    %83 = vmatprep.subr.mxu0 0.0
    %84 = vmatpush1.msra.mxu0 0.0
    %85 = vmatprep.subr.mxu0 0.0
    %86 = vmatpush1.msra.mxu0 0.0
    %87 = vmatprep.subr.mxu0 0.0
    %88 = vmatpush1.msra.mxu0 0.0
    %89 = vmatprep.subr.mxu0 0.0
    %90 = vmatpush1.msra.mxu0 0.0
    %91 = vmatprep.subr.mxu0 0.0
    %92 = vmatpush1.msra.mxu0 0.0
    %93 = vmatprep.subr.mxu0 0.0
    %94 = vmatpush1.msra.mxu0 0.0
    %95 = vmatprep.subr.mxu0 0.0
    %96 = vmatpush1.msra.mxu0 0.0
    %97 = vmatprep.subr.mxu0 0.0
    %98 = vmatpush1.msra.mxu0 0.0
    %99 = vmatprep.mubr.f32.mxu0 0.0
    %100 = vmatmul.mubr.f32.gmra.mrb[0].mxu0 %v33
    %v101 = vpop.f32.mrb[0].mxu0
    %v102 = vadd.f32 0.0, %v101
    %v103 = vpop.f32.mrb[0].mxu0
    %104 = vdwg.mxu0
    %v105 = vld [vmem:[%s2] sm:$0xff]
    %v106 = vld [vmem:[%s4] sm:$0xff]
    %v107 = vld [vmem:[%s4 + $0x8] sm:$0xff]
    %v108 = vld [vmem:[%s4 + $0x10] sm:$0xff]
    %v109 = vld [vmem:[%s4 + $0x18] sm:$0xff]
    %v111 = vsel %vm31, %v105, 0
    %113 = vmatprep.subr.mxu0 0.0
    %114 = vmatpush1.msra.mxu0 %v106
    %115 = vmatprep.subr.mxu0 0.0
    %116 = vmatpush1.msra.mxu0 %v107
    %117 = vmatprep.subr.mxu0 0.0
    %118 = vmatpush1.msra.mxu0 %v108
    %119 = vmatprep.subr.mxu0 0.0
    %120 = vmatpush1.msra.mxu0 %v109
    %121 = vmatprep.subr.mxu0 0.0
    %122 = vmatpush1.msra.mxu0 0.0
    %123 = vmatprep.subr.mxu0 0.0
    %124 = vmatpush1.msra.mxu0 0.0
    %125 = vmatprep.subr.mxu0 0.0
    %126 = vmatpush1.msra.mxu0 0.0
    %127 = vmatprep.subr.mxu0 0.0
    %128 = vmatpush1.msra.mxu0 0.0
    %129 = vmatprep.subr.mxu0 0.0
    %130 = vmatpush1.msra.mxu0 0.0
    %131 = vmatprep.subr.mxu0 0.0
    %132 = vmatpush1.msra.mxu0 0.0
    %133 = vmatprep.subr.mxu0 0.0
    %134 = vmatpush1.msra.mxu0 0.0
    %135 = vmatprep.subr.mxu0 0.0
    %136 = vmatpush1.msra.mxu0 0.0
    %137 = vmatprep.subr.mxu0 0.0
    %138 = vmatpush1.msra.mxu0 0.0
    %139 = vmatprep.subr.mxu0 0.0
    %140 = vmatpush1.msra.mxu0 0.0
    %141 = vmatprep.subr.mxu0 0.0
    %142 = vmatpush1.msra.mxu0 0.0
    %143 = vmatprep.subr.mxu0 0.0
    %144 = vmatpush1.msra.mxu0 0.0
    %145 = vmatprep.subr.mxu0 0.0
    %146 = vmatpush1.msra.mxu0 0.0
    %147 = vmatprep.subr.mxu0 0.0
    %148 = vmatpush1.msra.mxu0 0.0
    %149 = vmatprep.subr.mxu0 0.0
    %150 = vmatpush1.msra.mxu0 0.0
    %151 = vmatprep.subr.mxu0 0.0
    %152 = vmatpush1.msra.mxu0 0.0
    %153 = vmatprep.subr.mxu0 0.0
    %154 = vmatpush1.msra.mxu0 0.0
    %155 = vmatprep.subr.mxu0 0.0
    %156 = vmatpush1.msra.mxu0 0.0
    %157 = vmatprep.subr.mxu0 0.0
    %158 = vmatpush1.msra.mxu0 0.0
    %159 = vmatprep.subr.mxu0 0.0
    %160 = vmatpush1.msra.mxu0 0.0
    %161 = vmatprep.subr.mxu0 0.0
    %162 = vmatpush1.msra.mxu0 0.0
    %163 = vmatprep.subr.mxu0 0.0
    %164 = vmatpush1.msra.mxu0 0.0
    %165 = vmatprep.subr.mxu0 0.0
    %166 = vmatpush1.msra.mxu0 0.0
    %167 = vmatprep.subr.mxu0 0.0
    %168 = vmatpush1.msra.mxu0 0.0
    %169 = vmatprep.subr.mxu0 0.0
    %170 = vmatpush1.msra.mxu0 0.0
    %171 = vmatprep.subr.mxu0 0.0
    %172 = vmatpush1.msra.mxu0 0.0
    %173 = vmatprep.subr.mxu0 0.0
    %174 = vmatpush1.msra.mxu0 0.0
    %175 = vmatprep.subr.mxu0 0.0
    %176 = vmatpush1.msra.mxu0 0.0
    %177 = vmatprep.mubr.f32.mxu0 0.0
    %178 = vmatmul.mubr.f32.gmra.mrb[0].mxu0 %v111
    %v179 = vpop.f32.mrb[0].mxu0
    %v180 = vadd.f32 0.0, %v179
    %v181 = vpop.f32.mrb[0].mxu0
    %182 = vdwg.mxu0
    %v183 = vmul.f32 %v102, %v102
    %vm184 = vcmask 130048
    %v185 = vsel %vm184, %v183, 0.0
    %186 = vadd.xlane.f32.xlu0 %v185
    %v187 = vpop.xlane.xlu0 %186
    %v188 = vrsqrt.pop %v187
    %v189 = vmul.f32 %v102, %v188
    %v190 = vmul.f32 %v180, %v180
    %v191 = vsel %vm184, %v190, 0.0
    %192 = vadd.xlane.f32.xlu0 %v191
    %v193 = vpop.xlane.xlu0 %192
    %v194 = vrsqrt.pop %v193
    %v195 = vmul.f32 %v180, %v194
    %s196 = sld [smem:[#allocation2]]
    %v197 = vstv %s196
    %v198 = vmul.f32 %v189, %v197
    %v199 = vpack.c.bf16 %v198, %v198
    %vm200 = vcmask 125952
    %201 = vst.msk [vmem:[#allocation3] sm:$0xf] %vm200, %v199
    %v202 = vpack.c.bf16 %v195, %v195
    %203 = vst.msk [vmem:[#allocation5] sm:$0xf] %vm200, %v202
    %v204 = vmul.f32 %v198, %v195
    %v205 = vsel %vm184, %v204, 0.0
    %206 = vadd.xlane.f32.xlu0 %v205
    %v207 = vpop.xlane.xlu0 %206
    %v209 = vlaneseq
    %v210 = vand.u32 %v209, 127
    %v211 = vlaneseq
    %v212 = vshrl.u32 %v211, 7
    %v213 = vsub.s32 %v210, %v212
    %v214 = vrot.slane %v207, %v213
    %vm216 = vcmask 57344
    %217 = vst.msk [vmem:[#allocation7] sm:$0x1] %vm216, %v214
    // Predicated region
    $region22: #{tpu_custom_call.1} parent=1 // pred_check
      _
    $region23: #{tpu_custom_call.1} parent=1 // pred_check_branch
      %219 = sbr.rel (0) target = $region25
    $region24: #{tpu_custom_call.1} parent=1 // pred_region
      %s221 = ssub.s32 64, 64
      %222 = vsyncadd [#allocation4], %s221
      %s224 = sshll.u32 [#allocation3], 4
      %s225 = int_to_ptr.vmem [resolvable:$true] %s224
      %227 = dma.vmem_to_hbm [thread:$0]  %s225, 64, %s5, [#allocation4]
    $region25: #{tpu_custom_call.1} parent=1 // pred_fallthru
      _
    // Predicated region
    $region26: #{tpu_custom_call.1} parent=1 // pred_check
      _
    $region27: #{tpu_custom_call.1} parent=1 // pred_check_branch
      %229 = sbr.rel (0) target = $region29
    $region28: #{tpu_custom_call.1} parent=1 // pred_region
      %s231 = ssub.s32 64, 64
      %232 = vsyncadd [#allocation6], %s231
      %s234 = sshll.u32 [#allocation5], 4
      %s235 = int_to_ptr.vmem [resolvable:$true] %s234
      %237 = dma.vmem_to_hbm [thread:$0]  %s235, 64, %s6, [#allocation6]
    $region29: #{tpu_custom_call.1} parent=1 // pred_fallthru
      _
    // Predicated region
    $region30: #{tpu_custom_call.1} parent=1 // pred_check
      _
    $region31: #{tpu_custom_call.1} parent=1 // pred_check_branch
      %239 = sbr.rel (0) target = $region33
    $region32: #{tpu_custom_call.1} parent=1 // pred_region
      %s241 = ssub.s32 16, 16
      %242 = vsyncadd [#allocation6], %s241
      %s244 = sshll.u32 [#allocation7], 4
      %s245 = int_to_ptr.vmem [resolvable:$true] %s244
      %247 = dma.vmem_to_hbm [thread:$0]  %s245, 16, %s7, [#allocation6]
    $region33: #{tpu_custom_call.1} parent=1 // pred_fallthru
      _
    // Predicated region
    $region34: #{tpu_custom_call.1} parent=1 // pred_check
      _
    $region35: #{tpu_custom_call.1} parent=1 // pred_check_branch
      %249 = sbr.rel (0) target = $region37
    $region36: #{tpu_custom_call.1} parent=1 // pred_region
      %250 = dma.done [#allocation4], 64
    $region37: #{tpu_custom_call.1} parent=1 // pred_fallthru
      _
    // Predicated region
    $region38: #{tpu_custom_call.1} parent=1 // pred_check
      _
    $region39: #{tpu_custom_call.1} parent=1 // pred_check_branch
      %252 = sbr.rel (0) target = $region41
    $region40: #{tpu_custom_call.1} parent=1 // pred_region
      %253 = dma.done [#allocation6], 64
    $region41: #{tpu_custom_call.1} parent=1 // pred_fallthru
      _
    // Predicated region
    $region42: #{tpu_custom_call.1} parent=1 // pred_check
      _
    $region43: #{tpu_custom_call.1} parent=1 // pred_check_branch
      %255 = sbr.rel (0) target = $region45
    $region44: #{tpu_custom_call.1} parent=1 // pred_region
      %256 = dma.done [#allocation6], 16
    $region45: #{tpu_custom_call.1} parent=1 // pred_fallthru
      _
    %257 = vsyncpa [#allocation4], 1
    %258 = vsyncpa [#allocation6], 1

</llo_original>
